<compile_context>
chip_gen: v7x
topology: tpu7x:2x2x1
jax: 0.10.0
libtpu: 0.0.40
codegen_flags: <defaults>
</compile_context>

<pallas_src>
import math

import jax
import jax.numpy as jnp
from jax.experimental import pallas as pl
from jax.experimental.pallas import tpu as pltpu


# Per-block byte target. Double-buffered input + output blocks => ~4x this in VMEM,
# which leaves ample headroom on every generation (v7x: 64 MiB physical / 32 MiB scoped).
_TARGET_BLOCK_BYTES = 1 << 20


def _to_channels_last_kernel(x_ref, o_ref):
    """x_ref: (C, T_HW) or (NB, C, T_HW) tile of the NCHW input (spatial flattened).
    o_ref: matching NHWC tile, either
           (T_HW, C) / (NB, T_HW, C)          -- direct view (lane-dense iff C % 128 == 0)
        or (T_ROWS, 128) / (NB, T_ROWS, 128)  -- flat view, T_ROWS = T_HW * C // 128.
    The channels->minor transpose runs on the XLU; for the flat view the reshape packs
    the narrow-C result into full 128-lane rows so every HBM store is an unmasked vst."""
    y = jnp.swapaxes(x_ref[...], -1, -2)
    o_ref[...] = y.reshape(o_ref.shape)


def _pick_tiles(n, c, hw, itemsize, unit, target_bytes=_TARGET_BLOCK_BYTES):
    """Return (nb, t_hw): batch-group size and spatial tile length (multiple of `unit`
    when tiled, or the full spatial extent, which is always layout-legal)."""
    pos_bytes = c * itemsize            # bytes per spatial position (all channels)
    batch_bytes = pos_bytes * hw
    if batch_bytes <= target_bytes:
        # Small image: whole spatial extent per step; group batch elements per grid step
        # to amortize the ~0.35 us per-step pipeline overhead.
        nb = int(max(1, min(n, target_bytes // max(batch_bytes, 1))))
        return nb, hw
    # Large image: one batch element per step; largest multiple of `unit` within budget.
    t_hw = max(unit, (target_bytes // (pos_bytes * unit)) * unit)
    if t_hw >= hw:
        t_hw = hw                        # full dim is always layout-legal
    return 1, int(t_hw)


def _relayout_call(x2, use_flat):
    """x2: (N, C, HW). Returns (N, HW*C//128, 128) if use_flat else (N, HW, C)."""
    n, c, hw = x2.shape
    itemsize = x2.dtype.itemsize

    if use_flat:
        # Sublane multiple required for a tiled (t_rows, 128) output block:
        # 8 rows for 32-bit, 16 for 16-bit, 32 for 8-bit dtypes.
        sub = max(8, 32 // itemsize)
        unit = math.lcm(128, (128 * sub) // math.gcd(c, 128 * sub))
        nb, t_hw = _pick_tiles(n, c, hw, itemsize, unit)
        rows_total = (hw * c) // 128
        t_rows = rows_total if t_hw == hw else (t_hw * c) // 128
        out_shape = jax.ShapeDtypeStruct((n, rows_total, 128), x2.dtype)
        out_block = (t_rows, 128)
    else:
        nb, t_hw = _pick_tiles(n, c, hw, itemsize, 128)
        out_shape = jax.ShapeDtypeStruct((n, hw, c), x2.dtype)
        out_block = (t_hw, c)

    # nb == 1: squeeze the batch dim so the kernel works on clean 2-D tiles.
    b_dim = pl.Squeezed() if nb == 1 else nb
    grid = (pl.cdiv(n, nb), pl.cdiv(hw, t_hw))

    return pl.pallas_call(
        _to_channels_last_kernel,
        out_shape=out_shape,
        grid=grid,
        in_specs=[pl.BlockSpec((b_dim, c, t_hw), lambda b, t: (b, 0, t))],
        out_specs=pl.BlockSpec((b_dim,) + out_block, lambda b, t: (b, t, 0)),
        compiler_params=pltpu.CompilerParams(
            # Pure relayout, no reduction axis: both grid axes are parallel so both
            # v7x TensorCores get work; neutral on single-TC v5e/v6e.
            dimension_semantics=("parallel", "parallel"),
            vmem_limit_bytes=32 * 1024 * 1024,
        ),
    )(x2)


def to_channels_last(x):
    """x: (N, C, H, W) -> (N, H, W, C), same dtype (PyTorch x.permute(0, 2, 3, 1))."""
    n, c, h, w = x.shape
    hw = h * w
    x2 = x.reshape(n, c, hw)            # free row-major reshape, wrapper-side

    # The flat lane-dense output view pays off exactly when C alone is not a multiple
    # of 128 but the per-batch NHWC slab (HW*C) tiles cleanly into 128-lane rows.
    use_flat = (c % 128 != 0) and ((hw * c) % 128 == 0)

    if use_flat:
        try:
            out = _relayout_call(x2, use_flat=True)
        except Exception:
            # Compile-guard: the flat path leans on Mosaic's general minor-dim reshape
            # support; if lowering rejects it on this toolchain, fall back to the
            # (T_HW, C)-tiled store path (still correct, just lane-sparse for small C).
            out = _relayout_call(x2, use_flat=False)
    else:
        out = _relayout_call(x2, use_flat=False)

    return out.reshape(n, h, w, c)      # free row-major reshape back to NHWC


if __name__ == "__main__":
    key = jax.random.PRNGKey(0)
    N, C, H, W = 2, 4, 16, 16
    x = jax.random.normal(key, (N, C, H, W), dtype=jnp.float32)

    out = to_channels_last(x)
    out = jax.block_until_ready(out)

    # Reference: the PyTorch module's forward, x.permute(0, 2, 3, 1).
    ref = jnp.transpose(x, (0, 2, 3, 1))
    assert out.shape == (N, H, W, C), out.shape
    assert out.dtype == x.dtype
    assert jnp.array_equal(out, ref), "mismatch vs reference permute(0,2,3,1)"

    print("KERNEL_OK")
</pallas_src>

<mosaic_0001>
module attributes {stable_mosaic.version = 11 : i64} {
  func.func @_to_channels_last_kernel(%arg0: i32, %arg1: i32, %arg2: memref<2x4x256xf32, #tpu.memory_space<vmem>>, %arg3: memref<2x8x128xf32, #tpu.memory_space<vmem>>) attributes {dimension_semantics = [#tpu.dimension_semantics<parallel>, #tpu.dimension_semantics<parallel>], iteration_bounds = array<i64: 1, 1>, scalar_prefetch = 0 : i64, scratch_operands = 0 : i64, tpu.core_type = #tpu.core_type<tc>, window_params = [{transform_indices = @transform_0, window_bounds = array<i64: 2, 4, 256>}, {transform_indices = @transform_1, window_bounds = array<i64: 2, 8, 128>}]} {
    %c0 = arith.constant 0 : index
    %c0_0 = arith.constant 0 : index
    %c0_1 = arith.constant 0 : index
    %0 = vector.load %arg2[%c0, %c0_0, %c0_1] : memref<2x4x256xf32, #tpu.memory_space<vmem>>, vector<2x4x256xf32>
    %1 = tpu.transpose %0, [0, 2, 1] : vector<2x4x256xf32> -> vector<2x256x4xf32>
    %2 = vector.shape_cast %1 : vector<2x256x4xf32> to vector<2x8x128xf32>
    %c0_2 = arith.constant 0 : index
    %c0_3 = arith.constant 0 : index
    %c0_4 = arith.constant 0 : index
    %3 = vector.load %arg3[%c0_2, %c0_3, %c0_4] : memref<2x8x128xf32, #tpu.memory_space<vmem>>, vector<2x8x128xf32>
    tpu.vector_store %arg3[%c0_2, %c0_3, %c0_4], %2 {strides = array<i32>} : memref<2x8x128xf32, #tpu.memory_space<vmem>>, vector<2x8x128xf32>,
    return
  }
  func.func @transform_0(%arg0: i32, %arg1: i32) -> (i32, i32, i32) {
    %c0_i32 = arith.constant 0 : i32
    %c0_i32_0 = arith.constant 0 : i32
    return %arg0, %c0_i32, %arg1 : i32, i32, i32
  }
  func.func @transform_1(%arg0: i32, %arg1: i32) -> (i32, i32, i32) {
    %c0_i32 = arith.constant 0 : i32
    %c0_i32_0 = arith.constant 0 : i32
    return %arg0, %arg1, %c0_i32 : i32, i32, i32
  }
}

module attributes {stable_mosaic.version = 11 : i64} {
  func.func @_to_channels_last_kernel(%arg0: i32, %arg1: i32, %arg2: memref<2x4x256xf32, #tpu.memory_space<vmem>>, %arg3: memref<2x256x4xf32, #tpu.memory_space<vmem>>) attributes {dimension_semantics = [#tpu.dimension_semantics<parallel>, #tpu.dimension_semantics<parallel>], iteration_bounds = array<i64: 1, 1>, scalar_prefetch = 0 : i64, scratch_operands = 0 : i64, tpu.core_type = #tpu.core_type<tc>, window_params = [{transform_indices = @transform_0, window_bounds = array<i64: 2, 4, 256>}, {transform_indices = @transform_1, window_bounds = array<i64: 2, 256, 4>}]} {
    %c0 = arith.constant 0 : index
    %c0_0 = arith.constant 0 : index
    %c0_1 = arith.constant 0 : index
    %0 = vector.load %arg2[%c0, %c0_0, %c0_1] : memref<2x4x256xf32, #tpu.memory_space<vmem>>, vector<2x4x256xf32>
    %1 = tpu.transpose %0, [0, 2, 1] : vector<2x4x256xf32> -> vector<2x256x4xf32>
    %c0_2 = arith.constant 0 : index
    %c0_3 = arith.constant 0 : index
    %c0_4 = arith.constant 0 : index
    %2 = vector.load %arg3[%c0_2, %c0_3, %c0_4] : memref<2x256x4xf32, #tpu.memory_space<vmem>>, vector<2x256x4xf32>
    tpu.vector_store %arg3[%c0_2, %c0_3, %c0_4], %1 {strides = array<i32>} : memref<2x256x4xf32, #tpu.memory_space<vmem>>, vector<2x256x4xf32>,
    return
  }
  func.func @transform_0(%arg0: i32, %arg1: i32) -> (i32, i32, i32) {
    %c0_i32 = arith.constant 0 : i32
    %c0_i32_0 = arith.constant 0 : i32
    return %arg0, %c0_i32, %arg1 : i32, i32, i32
  }
  func.func @transform_1(%arg0: i32, %arg1: i32) -> (i32, i32, i32) {
    %c0_i32 = arith.constant 0 : i32
    %c0_i32_0 = arith.constant 0 : i32
    return %arg0, %arg1, %c0_i32 : i32, i32, i32
  }
}

</mosaic_0001>

<llo_original>
// kernel: tpu_custom_call.1
$region0: #{tpu_custom_call.1}
  #allocation0 [shape = 'u32[]', space=smem, size = 0x4, offset = 0x4, fixed_abs, tag = 'smem constant byte address 0x4 - core index']
  #allocation1 [shape = 'u32[144,128]{1,0:T(1,128)}', space=vmem, size = 0x12000, scoped, tag = 'internal scratch']
  %s0 = inlined_call_operand.hbm [shape: f32[2,4,256], index: 0, kind: input, shape index: {}]
  %s1 = inlined_call_operand.vmem [shape: f32[2,256,4], index: 1, kind: output, shape index: {}]
  %s2 = sld [smem:[#allocation0]]
  $region18: #{tpu_custom_call.1} parent=0
    _
  %s4 = ssub.s32 1, %s2
  %s5 = scalar_select 0, %s4, %s2
  $region1: #{tpu_custom_call.1} parent=0
    #allocation2 [shape = 'u8[8192]{0}', space=vmem, size = 0x2000, scoped, tag = 'input window, operand 0, single buffered']
    #allocation3 [shape = 's32[1]{0}', space=sflag, size = 0x4, scoped, tag = 'scoped memory for tpu_custom_call.1']
    %6 = vsyncpa [#allocation3], 0
    // Predicated region
    $region2: #{tpu_custom_call.1} parent=1 // pred_check
      _
    $region3: #{tpu_custom_call.1} parent=1 // pred_check_branch
      %8 = sbr.rel (0) target = $region5
    $region4: #{tpu_custom_call.1} parent=1 // pred_region
      %s10 = ssub.s32 256, 256
      %11 = vsyncadd [#allocation3], %s10
      %s12 = sshll.u32 [#allocation2], 4
      %s13 = int_to_ptr.vmem [resolvable:$true] %s12
      %18 = dma.hbm_to_vmem [thread:$0]  %s0, 256, %s13, [#allocation3], 128, 128, 8
    $region5: #{tpu_custom_call.1} parent=1 // pred_fallthru
      _
    // Predicated region
    $region6: #{tpu_custom_call.1} parent=1 // pred_check
      _
    $region7: #{tpu_custom_call.1} parent=1 // pred_check_branch
      %20 = sbr.rel (0) target = $region9
    $region8: #{tpu_custom_call.1} parent=1 // pred_region
      %21 = dma.done [#allocation3], 256
    $region9: #{tpu_custom_call.1} parent=1 // pred_fallthru
      _
    %v22 = vld [vmem:[#allocation2] sm:$0xff]
    %v23 = vld [vmem:[#allocation2 + $0x8] sm:$0xff]
    %v26 = vcombine.high %v22, %v22
    %v27 = vcombine.high %v23, %v23
    %30 = vxpose.xlu0.b32.start [1/16] %v22, 128
    %31 = vxpose.xlu0.b32.cont [2/16] 0.0, 128
    %32 = vxpose.xlu0.b32.cont [3/16] 0.0, 128
    %33 = vxpose.xlu0.b32.cont [4/16] 0.0, 128
    %34 = vxpose.xlu0.b32.cont [5/16] 0.0, 128
    %35 = vxpose.xlu0.b32.cont [6/16] 0.0, 128
    %36 = vxpose.xlu0.b32.cont [7/16] 0.0, 128
    %37 = vxpose.xlu0.b32.cont [8/16] 0.0, 128
    %38 = vxpose.xlu0.b32.cont [9/16] 0.0, 128
    %39 = vxpose.xlu0.b32.cont [10/16] 0.0, 128
    %40 = vxpose.xlu0.b32.cont [11/16] 0.0, 128
    %41 = vxpose.xlu0.b32.cont [12/16] 0.0, 128
    %42 = vxpose.xlu0.b32.cont [13/16] 0.0, 128
    %43 = vxpose.xlu0.b32.cont [14/16] 0.0, 128
    %44 = vxpose.xlu0.b32.cont [15/16] 0.0, 128
    %45 = vxpose.xlu0.b32.end [16/16] 0.0, 128
    %v46 = vpop.trf.xlu0
    %v47 = vpop.trf.xlu0
    %v48 = vpop.trf.xlu0
    %v49 = vpop.trf.xlu0
    %v50 = vpop.trf.xlu0
    %v51 = vpop.trf.xlu0
    %v52 = vpop.trf.xlu0
    %v53 = vpop.trf.xlu0
    %v54 = vpop.trf.xlu0
    %v55 = vpop.trf.xlu0
    %v56 = vpop.trf.xlu0
    %v57 = vpop.trf.xlu0
    %v58 = vpop.trf.xlu0
    %v59 = vpop.trf.xlu0
    %v60 = vpop.trf.xlu0
    %v61 = vpop.trf.xlu0
    %62 = vxpose.xlu0.b32.start [1/16] %v26, 128
    %63 = vxpose.xlu0.b32.cont [2/16] 0.0, 128
    %64 = vxpose.xlu0.b32.cont [3/16] 0.0, 128
    %65 = vxpose.xlu0.b32.cont [4/16] 0.0, 128
    %66 = vxpose.xlu0.b32.cont [5/16] 0.0, 128
    %67 = vxpose.xlu0.b32.cont [6/16] 0.0, 128
    %68 = vxpose.xlu0.b32.cont [7/16] 0.0, 128
    %69 = vxpose.xlu0.b32.cont [8/16] 0.0, 128
    %70 = vxpose.xlu0.b32.cont [9/16] 0.0, 128
    %71 = vxpose.xlu0.b32.cont [10/16] 0.0, 128
    %72 = vxpose.xlu0.b32.cont [11/16] 0.0, 128
    %73 = vxpose.xlu0.b32.cont [12/16] 0.0, 128
    %74 = vxpose.xlu0.b32.cont [13/16] 0.0, 128
    %75 = vxpose.xlu0.b32.cont [14/16] 0.0, 128
    %76 = vxpose.xlu0.b32.cont [15/16] 0.0, 128
    %77 = vxpose.xlu0.b32.end [16/16] 0.0, 128
    %v78 = vpop.trf.xlu0
    %v79 = vpop.trf.xlu0
    %v80 = vpop.trf.xlu0
    %v81 = vpop.trf.xlu0
    %v82 = vpop.trf.xlu0
    %v83 = vpop.trf.xlu0
    %v84 = vpop.trf.xlu0
    %v85 = vpop.trf.xlu0
    %v86 = vpop.trf.xlu0
    %v87 = vpop.trf.xlu0
    %v88 = vpop.trf.xlu0
    %v89 = vpop.trf.xlu0
    %v90 = vpop.trf.xlu0
    %v91 = vpop.trf.xlu0
    %v92 = vpop.trf.xlu0
    %v93 = vpop.trf.xlu0
    %94 = vxpose.xlu0.b32.start [1/16] %v23, 128
    %95 = vxpose.xlu0.b32.cont [2/16] 0.0, 128
    %96 = vxpose.xlu0.b32.cont [3/16] 0.0, 128
    %97 = vxpose.xlu0.b32.cont [4/16] 0.0, 128
    %98 = vxpose.xlu0.b32.cont [5/16] 0.0, 128
    %99 = vxpose.xlu0.b32.cont [6/16] 0.0, 128
    %100 = vxpose.xlu0.b32.cont [7/16] 0.0, 128
    %101 = vxpose.xlu0.b32.cont [8/16] 0.0, 128
    %102 = vxpose.xlu0.b32.cont [9/16] 0.0, 128
    %103 = vxpose.xlu0.b32.cont [10/16] 0.0, 128
    %104 = vxpose.xlu0.b32.cont [11/16] 0.0, 128
    %105 = vxpose.xlu0.b32.cont [12/16] 0.0, 128
    %106 = vxpose.xlu0.b32.cont [13/16] 0.0, 128
    %107 = vxpose.xlu0.b32.cont [14/16] 0.0, 128
    %108 = vxpose.xlu0.b32.cont [15/16] 0.0, 128
    %109 = vxpose.xlu0.b32.end [16/16] 0.0, 128
    %v110 = vpop.trf.xlu0
    %v111 = vpop.trf.xlu0
    %v112 = vpop.trf.xlu0
    %v113 = vpop.trf.xlu0
    %v114 = vpop.trf.xlu0
    %v115 = vpop.trf.xlu0
    %v116 = vpop.trf.xlu0
    %v117 = vpop.trf.xlu0
    %v118 = vpop.trf.xlu0
    %v119 = vpop.trf.xlu0
    %v120 = vpop.trf.xlu0
    %v121 = vpop.trf.xlu0
    %v122 = vpop.trf.xlu0
    %v123 = vpop.trf.xlu0
    %v124 = vpop.trf.xlu0
    %v125 = vpop.trf.xlu0
    %126 = vxpose.xlu0.b32.start [1/16] %v27, 128
    %127 = vxpose.xlu0.b32.cont [2/16] 0.0, 128
    %128 = vxpose.xlu0.b32.cont [3/16] 0.0, 128
    %129 = vxpose.xlu0.b32.cont [4/16] 0.0, 128
    %130 = vxpose.xlu0.b32.cont [5/16] 0.0, 128
    %131 = vxpose.xlu0.b32.cont [6/16] 0.0, 128
    %132 = vxpose.xlu0.b32.cont [7/16] 0.0, 128
    %133 = vxpose.xlu0.b32.cont [8/16] 0.0, 128
    %134 = vxpose.xlu0.b32.cont [9/16] 0.0, 128
    %135 = vxpose.xlu0.b32.cont [10/16] 0.0, 128
    %136 = vxpose.xlu0.b32.cont [11/16] 0.0, 128
    %137 = vxpose.xlu0.b32.cont [12/16] 0.0, 128
    %138 = vxpose.xlu0.b32.cont [13/16] 0.0, 128
    %139 = vxpose.xlu0.b32.cont [14/16] 0.0, 128
    %140 = vxpose.xlu0.b32.cont [15/16] 0.0, 128
    %141 = vxpose.xlu0.b32.end [16/16] 0.0, 128
    %v142 = vpop.trf.xlu0
    %v143 = vpop.trf.xlu0
    %v144 = vpop.trf.xlu0
    %v145 = vpop.trf.xlu0
    %v146 = vpop.trf.xlu0
    %v147 = vpop.trf.xlu0
    %v148 = vpop.trf.xlu0
    %v149 = vpop.trf.xlu0
    %v150 = vpop.trf.xlu0
    %v151 = vpop.trf.xlu0
    %v152 = vpop.trf.xlu0
    %v153 = vpop.trf.xlu0
    %v154 = vpop.trf.xlu0
    %v155 = vpop.trf.xlu0
    %v156 = vpop.trf.xlu0
    %v157 = vpop.trf.xlu0
    %vm158 = vcmask 31744
    %159 = vst.msk [vmem:[%s1] sm:$0xff] %vm158, %v46
    %160 = vst.msk [vmem:[%s1 + $0x8] sm:$0xff] %vm158, %v47
    %161 = vst.msk [vmem:[%s1 + $0x10] sm:$0xff] %vm158, %v48
    %162 = vst.msk [vmem:[%s1 + $0x18] sm:$0xff] %vm158, %v49
    %163 = vst.msk [vmem:[%s1 + $0x20] sm:$0xff] %vm158, %v50
    %164 = vst.msk [vmem:[%s1 + $0x28] sm:$0xff] %vm158, %v51
    %165 = vst.msk [vmem:[%s1 + $0x30] sm:$0xff] %vm158, %v52
    %166 = vst.msk [vmem:[%s1 + $0x38] sm:$0xff] %vm158, %v53
    %167 = vst.msk [vmem:[%s1 + $0x40] sm:$0xff] %vm158, %v54
    %168 = vst.msk [vmem:[%s1 + $0x48] sm:$0xff] %vm158, %v55
    %169 = vst.msk [vmem:[%s1 + $0x50] sm:$0xff] %vm158, %v56
    %170 = vst.msk [vmem:[%s1 + $0x58] sm:$0xff] %vm158, %v57
    %171 = vst.msk [vmem:[%s1 + $0x60] sm:$0xff] %vm158, %v58
    %172 = vst.msk [vmem:[%s1 + $0x68] sm:$0xff] %vm158, %v59
    %173 = vst.msk [vmem:[%s1 + $0x70] sm:$0xff] %vm158, %v60
    %174 = vst.msk [vmem:[%s1 + $0x78] sm:$0xff] %vm158, %v61
    %175 = vst.msk [vmem:[%s1 + $0x80] sm:$0xff] %vm158, %v78
    %176 = vst.msk [vmem:[%s1 + $0x88] sm:$0xff] %vm158, %v79
    %177 = vst.msk [vmem:[%s1 + $0x90] sm:$0xff] %vm158, %v80
    %178 = vst.msk [vmem:[%s1 + $0x98] sm:$0xff] %vm158, %v81
    %179 = vst.msk [vmem:[%s1 + $0xa0] sm:$0xff] %vm158, %v82
    %180 = vst.msk [vmem:[%s1 + $0xa8] sm:$0xff] %vm158, %v83
    %181 = vst.msk [vmem:[%s1 + $0xb0] sm:$0xff] %vm158, %v84
    %182 = vst.msk [vmem:[%s1 + $0xb8] sm:$0xff] %vm158, %v85
    %183 = vst.msk [vmem:[%s1 + $0xc0] sm:$0xff] %vm158, %v86
    %184 = vst.msk [vmem:[%s1 + $0xc8] sm:$0xff] %vm158, %v87
    %185 = vst.msk [vmem:[%s1 + $0xd0] sm:$0xff] %vm158, %v88
    %186 = vst.msk [vmem:[%s1 + $0xd8] sm:$0xff] %vm158, %v89
    %187 = vst.msk [vmem:[%s1 + $0xe0] sm:$0xff] %vm158, %v90
    %188 = vst.msk [vmem:[%s1 + $0xe8] sm:$0xff] %vm158, %v91
    %189 = vst.msk [vmem:[%s1 + $0xf0] sm:$0xff] %vm158, %v92
    %190 = vst.msk [vmem:[%s1 + $0xf8] sm:$0xff] %vm158, %v93
    %191 = vst.msk [vmem:[%s1 + $0x100] sm:$0xff] %vm158, %v110
    %192 = vst.msk [vmem:[%s1 + $0x108] sm:$0xff] %vm158, %v111
    %193 = vst.msk [vmem:[%s1 + $0x110] sm:$0xff] %vm158, %v112
    %194 = vst.msk [vmem:[%s1 + $0x118] sm:$0xff] %vm158, %v113
    %195 = vst.msk [vmem:[%s1 + $0x120] sm:$0xff] %vm158, %v114
    %196 = vst.msk [vmem:[%s1 + $0x128] sm:$0xff] %vm158, %v115
    %197 = vst.msk [vmem:[%s1 + $0x130] sm:$0xff] %vm158, %v116
    %198 = vst.msk [vmem:[%s1 + $0x138] sm:$0xff] %vm158, %v117
    %199 = vst.msk [vmem:[%s1 + $0x140] sm:$0xff] %vm158, %v118
    %200 = vst.msk [vmem:[%s1 + $0x148] sm:$0xff] %vm158, %v119
    %201 = vst.msk [vmem:[%s1 + $0x150] sm:$0xff] %vm158, %v120
    %202 = vst.msk [vmem:[%s1 + $0x158] sm:$0xff] %vm158, %v121
    %203 = vst.msk [vmem:[%s1 + $0x160] sm:$0xff] %vm158, %v122
    %204 = vst.msk [vmem:[%s1 + $0x168] sm:$0xff] %vm158, %v123
    %205 = vst.msk [vmem:[%s1 + $0x170] sm:$0xff] %vm158, %v124
    %206 = vst.msk [vmem:[%s1 + $0x178] sm:$0xff] %vm158, %v125
    %207 = vst.msk [vmem:[%s1 + $0x180] sm:$0xff] %vm158, %v142
    %208 = vst.msk [vmem:[%s1 + $0x188] sm:$0xff] %vm158, %v143
    %209 = vst.msk [vmem:[%s1 + $0x190] sm:$0xff] %vm158, %v144
    %210 = vst.msk [vmem:[%s1 + $0x198] sm:$0xff] %vm158, %v145
    %211 = vst.msk [vmem:[%s1 + $0x1a0] sm:$0xff] %vm158, %v146
    %212 = vst.msk [vmem:[%s1 + $0x1a8] sm:$0xff] %vm158, %v147
    %213 = vst.msk [vmem:[%s1 + $0x1b0] sm:$0xff] %vm158, %v148
    %214 = vst.msk [vmem:[%s1 + $0x1b8] sm:$0xff] %vm158, %v149
    %215 = vst.msk [vmem:[%s1 + $0x1c0] sm:$0xff] %vm158, %v150
    %216 = vst.msk [vmem:[%s1 + $0x1c8] sm:$0xff] %vm158, %v151
    %217 = vst.msk [vmem:[%s1 + $0x1d0] sm:$0xff] %vm158, %v152
    %218 = vst.msk [vmem:[%s1 + $0x1d8] sm:$0xff] %vm158, %v153
    %219 = vst.msk [vmem:[%s1 + $0x1e0] sm:$0xff] %vm158, %v154
    %220 = vst.msk [vmem:[%s1 + $0x1e8] sm:$0xff] %vm158, %v155
    %221 = vst.msk [vmem:[%s1 + $0x1f0] sm:$0xff] %vm158, %v156
    %222 = vst.msk [vmem:[%s1 + $0x1f8] sm:$0xff] %vm158, %v157
    // Predicated region
    $region10: #{tpu_custom_call.1} parent=1 // pred_check
      _
    $region11: #{tpu_custom_call.1} parent=1 // pred_check_branch
      %224 = sbr.rel (0) target = $region13
    $region12: #{tpu_custom_call.1} parent=1 // pred_region
      _
    $region13: #{tpu_custom_call.1} parent=1 // pred_fallthru
      _
    // Predicated region
    $region14: #{tpu_custom_call.1} parent=1 // pred_check
      _
    $region15: #{tpu_custom_call.1} parent=1 // pred_check_branch
      %226 = sbr.rel (0) target = $region17
    $region16: #{tpu_custom_call.1} parent=1 // pred_region
      _
    $region17: #{tpu_custom_call.1} parent=1 // pred_fallthru
      _
    %227 = vsyncpa [#allocation3], 1

</llo_original>
